<compile_context>
chip_gen: v7x
topology: tpu7x:2x2x1
jax: 0.10.0
libtpu: 0.0.40
codegen_flags: <defaults>
</compile_context>

<pallas_src>
import functools

import jax
import jax.numpy as jnp
from jax.experimental import pallas as pl
from jax.experimental.pallas import tpu as pltpu


_VMEM_LIMIT = 48 * 1024 * 1024        # safe on v5e/v6e/v7x; never binding here
_ADJ_TILE_BUDGET = 12 * 1024 * 1024   # adj row-tile double-buffer budget


# --------------------------------------------------------------------------
# helpers
# --------------------------------------------------------------------------
def _round_up(x, m):
    return ((x + m - 1) // m) * m


def _pad2(a, rows, cols):
    return jnp.pad(a, ((0, rows - a.shape[0]), (0, cols - a.shape[1])))


def _choose_tm(n):
    """Propagate row tile: power of two, >=16 (bf16), <=512, and <= n_pad/2
    when possible so the 'parallel' axis has >=2 blocks (v7x megacore)."""
    n16 = _round_up(max(n, 1), 16)
    half = max(16, n16 // 2)
    for c in (512, 256, 128, 64, 32, 16):
        if c <= half:
            return c
    return 16


def _choose_tk(n_pad, tm, budget_bytes):
    """Adjacency K tile. Full-K (single step, no scratch accumulator) when the
    (tm, n_pad) bf16 double buffer fits the budget; otherwise the largest
    128-aligned divisor of n_pad that fits."""
    if 2 * (tm * n_pad * 2) <= budget_bytes or n_pad % 128 != 0:
        return n_pad
    cap_elems = max(128, budget_bytes // (2 * tm * 2))
    ks = 2
    while ks <= n_pad // 128:
        if n_pad % ks == 0:
            tk = n_pad // ks
            if tk % 128 == 0 and tk <= cap_elems:
                return tk
        ks += 1
    return 128


def _choose_tm_support(n_pad):
    """Row tile for the support matmul: as large as divides n_pad (<=1024)."""
    for c in (1024, 512, 256, 128, 64, 32, 16):
        if n_pad % c == 0:
            return c
    return n_pad


# --------------------------------------------------------------------------
# Kernels
# --------------------------------------------------------------------------
def _support_kernel(x_ref, w_ref, out_ref):
    # s = x @ W   (bf16 lane-dense inputs, f32 accumulate, bf16 output)
    out_ref[...] = jnp.dot(
        x_ref[...], w_ref[...], preferred_element_type=jnp.float32
    ).astype(out_ref.dtype)


def _prop1_kernel(adj_ref, s1_ref, b1_ref, w2_ref, out_ref, *acc, tk):
    """s2 = relu(adj @ s1 + b1) @ W2, K-accumulated over adj columns.
    Scratch accumulator is only present (in *acc) when there is >1 K step."""

    def epilogue(acc_val):
        h = jnp.maximum(acc_val + b1_ref[...], 0.0)
        out_ref[...] = jnp.dot(
            h.astype(w2_ref.dtype), w2_ref[...],
            preferred_element_type=jnp.float32,
        ).astype(out_ref.dtype)

    if not acc:  # single K step: no scratch round-trip
        epilogue(jnp.dot(adj_ref[...], s1_ref[...],
                         preferred_element_type=jnp.float32))
        return

    acc_ref, = acc
    k = pl.program_id(1)

    @pl.when(k == 0)
    def _():
        acc_ref[...] = jnp.zeros_like(acc_ref)

    off = pl.multiple_of(k * tk, 128)
    acc_ref[...] += jnp.dot(adj_ref[...], s1_ref[pl.ds(off, tk), :],
                            preferred_element_type=jnp.float32)

    @pl.when(k == pl.num_programs(1) - 1)
    def _():
        epilogue(acc_ref[...])


def _prop2_kernel(adj_ref, s2_ref, b2_ref, out_ref, *acc,
                  tk, activation, valid_cols):
    """z = adj @ s2 + b2 (+ optional masked log_softmax)."""

    def epilogue(acc_val):
        z = acc_val + b2_ref[...]
        if activation == "log_softmax":
            # Mask zero-padded class columns out of the LSE.
            col = jax.lax.broadcasted_iota(jnp.int32, z.shape, 1)
            zm = jnp.where(col < valid_cols, z, -jnp.inf)
            m = jnp.max(zm, axis=1, keepdims=True)
            lse = m + jnp.log(jnp.sum(jnp.exp(zm - m), axis=1, keepdims=True))
            z = z - lse
        out_ref[...] = z.astype(out_ref.dtype)

    if not acc:
        epilogue(jnp.dot(adj_ref[...], s2_ref[...],
                         preferred_element_type=jnp.float32))
        return

    acc_ref, = acc
    k = pl.program_id(1)

    @pl.when(k == 0)
    def _():
        acc_ref[...] = jnp.zeros_like(acc_ref)

    off = pl.multiple_of(k * tk, 128)
    acc_ref[...] += jnp.dot(adj_ref[...], s2_ref[pl.ds(off, tk), :],
                            preferred_element_type=jnp.float32)

    @pl.when(k == pl.num_programs(1) - 1)
    def _():
        epilogue(acc_ref[...])


# --------------------------------------------------------------------------
# pallas_call wrappers
# --------------------------------------------------------------------------
def _support(x, w, tm_s):
    n_pad, f_in = x.shape
    f_out = w.shape[1]
    cost = pl.CostEstimate(
        flops=2 * n_pad * f_in * f_out, transcendentals=0,
        bytes_accessed=x.size * 2 + w.size * 2 + n_pad * f_out * 2)
    return pl.pallas_call(
        _support_kernel,
        out_shape=jax.ShapeDtypeStruct((n_pad, f_out), jnp.bfloat16),
        grid=(n_pad // tm_s,),
        in_specs=[
            pl.BlockSpec((tm_s, f_in), lambda i: (i, 0)),
            pl.BlockSpec((f_in, f_out), lambda i: (0, 0)),   # W resident
        ],
        out_specs=pl.BlockSpec((tm_s, f_out), lambda i: (i, 0)),
        compiler_params=pltpu.CompilerParams(
            dimension_semantics=("parallel",),
            vmem_limit_bytes=_VMEM_LIMIT),
        cost_estimate=cost,
    )(x, w)


def _propagate1(adj, s1, b1, w2, tm, tk):
    n_pad = adj.shape[0]
    f_hid = s1.shape[1]
    f_out = w2.shape[1]
    n_k = n_pad // tk
    kernel = functools.partial(_prop1_kernel, tk=tk)
    scratch = [] if n_k == 1 else [pltpu.VMEM((tm, f_hid), jnp.float32)]
    cost = pl.CostEstimate(
        flops=2 * n_pad * n_pad * f_hid + 2 * n_pad * f_hid * f_out,
        transcendentals=0,
        bytes_accessed=(adj.size * 2 + s1.size * 2 + b1.size * 4
                        + w2.size * 2 + n_pad * f_out * 2))
    return pl.pallas_call(
        kernel,
        out_shape=jax.ShapeDtypeStruct((n_pad, f_out), jnp.bfloat16),
        grid=(n_pad // tm, n_k),
        in_specs=[
            pl.BlockSpec((tm, tk), lambda i, k: (i, k)),          # adj stream
            pl.BlockSpec((n_pad, f_hid), lambda i, k: (0, 0)),    # s1 resident
            pl.BlockSpec((1, f_hid), lambda i, k: (0, 0)),        # b1 resident
            pl.BlockSpec((f_hid, f_out), lambda i, k: (0, 0)),    # W2 resident
        ],
        out_specs=pl.BlockSpec((tm, f_out), lambda i, k: (i, 0)),
        scratch_shapes=scratch,
        compiler_params=pltpu.CompilerParams(
            dimension_semantics=("parallel", "arbitrary"),
            vmem_limit_bytes=_VMEM_LIMIT),
        cost_estimate=cost,
    )(adj, s1, b1, w2)


def _propagate2(adj, s2, b2, tm, tk, *, activation, valid_cols):
    n_pad = adj.shape[0]
    f_out = s2.shape[1]
    n_k = n_pad // tk
    kernel = functools.partial(_prop2_kernel, tk=tk,
                               activation=activation, valid_cols=valid_cols)
    scratch = [] if n_k == 1 else [pltpu.VMEM((tm, f_out), jnp.float32)]
    cost = pl.CostEstimate(
        flops=2 * n_pad * n_pad * f_out,
        transcendentals=(n_pad * f_out if activation == "log_softmax" else 0),
        bytes_accessed=(adj.size * 2 + s2.size * 2 + b2.size * 4
                        + n_pad * f_out * 4))
    return pl.pallas_call(
        kernel,
        out_shape=jax.ShapeDtypeStruct((n_pad, f_out), jnp.float32),
        grid=(n_pad // tm, n_k),
        in_specs=[
            pl.BlockSpec((tm, tk), lambda i, k: (i, k)),          # adj stream
            pl.BlockSpec((n_pad, f_out), lambda i, k: (0, 0)),    # s2 resident
            pl.BlockSpec((1, f_out), lambda i, k: (0, 0)),        # b2 resident
        ],
        out_specs=pl.BlockSpec((tm, f_out), lambda i, k: (i, 0)),
        scratch_shapes=scratch,
        compiler_params=pltpu.CompilerParams(
            dimension_semantics=("parallel", "arbitrary"),
            vmem_limit_bytes=_VMEM_LIMIT),
        cost_estimate=cost,
    )(adj, s2, b2)


# --------------------------------------------------------------------------
# Full GCN forward
# --------------------------------------------------------------------------
def gcn_forward(x, adj, w1, b1, w2, b2, with_softmax=True,
                adj_tile_budget_bytes=_ADJ_TILE_BUDGET):
    n, nfeat = x.shape
    nhid = w1.shape[1]
    nclass = w2.shape[1]
    assert adj.shape == (n, n)
    assert w1.shape == (nfeat, nhid) and b1.shape == (1, nhid)
    assert w2.shape == (nhid, nclass) and b2.shape == (1, nclass)

    # ---- tile / padding geometry ----
    tm = _choose_tm(n)                       # propagate row tile (>=2 blocks)
    n_pad = _round_up(n, tm)
    tk = _choose_tk(n_pad, tm, adj_tile_budget_bytes)
    tm_s = _choose_tm_support(n_pad)         # independent support row tile
    nfeat_pad = _round_up(nfeat, 128)        # lane-dense / 128-aligned K
    nhid_pad = _round_up(nhid, 128)
    nclass_pad = _round_up(nclass, 128)

    # ---- pad + cast operands (bf16 streams, f32 biases) ----
    x_bf = _pad2(x, n_pad, nfeat_pad).astype(jnp.bfloat16)
    adj_bf = _pad2(adj, n_pad, n_pad).astype(jnp.bfloat16)
    w1_bf = _pad2(w1, nfeat_pad, nhid_pad).astype(jnp.bfloat16)
    b1_p = _pad2(b1, 1, nhid_pad).astype(jnp.float32)
    w2_bf = _pad2(w2, nhid_pad, nclass_pad).astype(jnp.bfloat16)
    b2_p = _pad2(b2, 1, nclass_pad).astype(jnp.float32)

    # ---- layer 1 support: s1 = x @ W1 ----
    s1 = _support(x_bf, w1_bf, tm_s)

    # ---- fused layer-1 propagate + layer-2 support:
    #      s2 = relu(adj @ s1 + b1) @ W2      (dropout: identity at inference)
    s2 = _propagate1(adj_bf, s1, b1_p, w2_bf, tm, tk)

    # ---- layer 2 propagate: z = adj @ s2 + b2 (+ optional log_softmax) ----
    act = "log_softmax" if with_softmax else "none"
    z = _propagate2(adj_bf, s2, b2_p, tm, tk,
                    activation=act, valid_cols=nclass)

    return z[:n, :nclass]


def _reference(x, adj, w1, b1, w2, b2, with_softmax=True):
    h = jnp.maximum(adj @ (x @ w1) + b1, 0.0)
    z = adj @ (h @ w2) + b2
    if with_softmax:
        z = jax.nn.log_softmax(z, axis=1)
    return z


# --------------------------------------------------------------------------
# Self-test
# --------------------------------------------------------------------------
def _make_inputs(key, n, nfeat, nhid, nclass):
    kx, ka, kw1, kb1, kw2, kb2 = jax.random.split(key, 6)
    x = jax.random.normal(kx, (n, nfeat), dtype=jnp.float32)

    # symmetric row-normalized adjacency with self loops (deterministic)
    a = (jax.random.uniform(ka, (n, n)) > 0.7).astype(jnp.float32)
    a = jnp.maximum(a, a.T) + jnp.eye(n, dtype=jnp.float32)
    adj = a / jnp.sum(a, axis=1, keepdims=True)

    stdv1 = 1.0 / (nhid ** 0.5)
    w1 = jax.random.uniform(kw1, (nfeat, nhid), minval=-stdv1, maxval=stdv1,
                            dtype=jnp.float32)
    b1 = jax.random.uniform(kb1, (1, nhid), minval=-stdv1, maxval=stdv1,
                            dtype=jnp.float32)
    stdv2 = 1.0 / (nclass ** 0.5)
    w2 = jax.random.uniform(kw2, (nhid, nclass), minval=-stdv2, maxval=stdv2,
                            dtype=jnp.float32)
    b2 = jax.random.uniform(kb2, (1, nclass), minval=-stdv2, maxval=stdv2,
                            dtype=jnp.float32)
    return x, adj, w1, b1, w2, b2


if __name__ == "__main__":
    key = jax.random.PRNGKey(0)
    k1, k2 = jax.random.split(key)
    ATOL = RTOL = 3e-2   # bf16 adjacency / activation streams vs f32 reference

    # -- test 1: small module-consistent shapes, single row tile, full-K --
    N, NFEAT, NHID, NCLASS = 16, 8, 32, 4
    x, adj, w1, b1, w2, b2 = _make_inputs(k1, N, NFEAT, NHID, NCLASS)

    out = jax.block_until_ready(gcn_forward(x, adj, w1, b1, w2, b2, True))
    ref = _reference(x, adj, w1, b1, w2, b2, True)
    assert out.shape == (N, NCLASS)
    assert jnp.allclose(out, ref, atol=ATOL, rtol=RTOL), "mismatch (softmax)"

    out2 = jax.block_until_ready(gcn_forward(x, adj, w1, b1, w2, b2, False))
    ref2 = _reference(x, adj, w1, b1, w2, b2, False)
    assert jnp.allclose(out2, ref2, atol=ATOL, rtol=RTOL), "mismatch (no softmax)"

    # -- test 2: non-multiple shapes, multi row-tile grid, full-K path --
    N2, NFEAT2, NHID2, NCLASS2 = 300, 40, 33, 7
    x, adj, w1, b1, w2, b2 = _make_inputs(k2, N2, NFEAT2, NHID2, NCLASS2)

    out = jax.block_until_ready(gcn_forward(x, adj, w1, b1, w2, b2, True))
    ref = _reference(x, adj, w1, b1, w2, b2, True)
    assert out.shape == (N2, NCLASS2)
    assert jnp.allclose(out, ref, atol=ATOL, rtol=RTOL), "mismatch (tiled rows)"

    # -- test 3: force multi-step K accumulation (tiny adj tile budget) --
    out = jax.block_until_ready(
        gcn_forward(x, adj, w1, b1, w2, b2, True,
                    adj_tile_budget_bytes=64 * 1024))
    assert jnp.allclose(out, ref, atol=ATOL, rtol=RTOL), "mismatch (tiled K)"

    print("KERNEL_OK")
</pallas_src>

<mosaic_0001>
module attributes {stable_mosaic.version = 11 : i64} {
  func.func @_support_kernel(%arg0: i32, %arg1: memref<16x128xbf16, #tpu.memory_space<vmem>>, %arg2: memref<128x128xbf16, #tpu.memory_space<vmem>>, %arg3: memref<16x128xbf16, #tpu.memory_space<vmem>>) attributes {dimension_semantics = [#tpu.dimension_semantics<parallel>], iteration_bounds = array<i64: 1>, scalar_prefetch = 0 : i64, scratch_operands = 0 : i64, tpu.core_type = #tpu.core_type<tc>, window_params = [{transform_indices = @transform_0, window_bounds = array<i64: 16, 128>}, {pipeline_mode = #tpu.pipeline_mode<synchronous>, transform_indices = @transform_1, window_bounds = array<i64: 128, 128>}, {transform_indices = @transform_2, window_bounds = array<i64: 16, 128>}]} {
    %c0 = arith.constant 0 : index
    %c0_0 = arith.constant 0 : index
    %0 = vector.load %arg1[%c0, %c0_0] : memref<16x128xbf16, #tpu.memory_space<vmem>>, vector<16x128xbf16>
    %c0_1 = arith.constant 0 : index
    %c0_2 = arith.constant 0 : index
    %1 = vector.load %arg2[%c0_1, %c0_2] : memref<128x128xbf16, #tpu.memory_space<vmem>>, vector<128x128xbf16>
    %cst = arith.constant dense<0.000000e+00> : vector<16x128xf32>
    %2 = tpu.matmul %0, %1, %cst {dimension_numbers = #tpu.dot_dimension_numbers<[1], [0], [0], [1], [0, 0, 1, 1], [], []>} : vector<16x128xbf16>, vector<128x128xbf16>, vector<16x128xf32> -> vector<16x128xf32>
    %3 = arith.truncf %2 : vector<16x128xf32> to vector<16x128xbf16>
    %c0_3 = arith.constant 0 : index
    %c0_4 = arith.constant 0 : index
    %4 = vector.load %arg3[%c0_3, %c0_4] : memref<16x128xbf16, #tpu.memory_space<vmem>>, vector<16x128xbf16>
    tpu.vector_store %arg3[%c0_3, %c0_4], %3 {strides = array<i32>} : memref<16x128xbf16, #tpu.memory_space<vmem>>, vector<16x128xbf16>,
    return
  }
  func.func @transform_0(%arg0: i32) -> (i32, i32) {
    %c0_i32 = arith.constant 0 : i32
    %c0_i32_0 = arith.constant 0 : i32
    return %arg0, %c0_i32 : i32, i32
  }
  func.func @transform_1(%arg0: i32) -> (i32, i32) {
    %c0_i32 = arith.constant 0 : i32
    %c0_i32_0 = arith.constant 0 : i32
    %c0_i32_1 = arith.constant 0 : i32
    return %c0_i32, %c0_i32_0 : i32, i32
  }
  func.func @transform_2(%arg0: i32) -> (i32, i32) {
    %c0_i32 = arith.constant 0 : i32
    %c0_i32_0 = arith.constant 0 : i32
    return %arg0, %c0_i32 : i32, i32
  }
}

</mosaic_0001>

<llo_original>
// kernel: tpu_custom_call.1
$region0: #{tpu_custom_call.1}
  #allocation0 [shape = 'u32[]', space=smem, size = 0x4, offset = 0x4, fixed_abs, tag = 'smem constant byte address 0x4 - core index']
  #allocation1 [shape = 'u32[144,128]{1,0:T(1,128)}', space=vmem, size = 0x12000, scoped, tag = 'internal scratch']
  %s0 = inlined_call_operand.hbm [shape: bf16[16,128], index: 0, kind: input, shape index: {}]
  %s1 = inlined_call_operand.hbm [shape: bf16[128,128], index: 1, kind: input, shape index: {}]
  %s2 = inlined_call_operand.hbm [shape: bf16[16,128], index: 2, kind: output, shape index: {}]
  %s3 = sld [smem:[#allocation0]]
  $region26: #{tpu_custom_call.1} parent=0
    _
  %s5 = ssub.s32 1, %s3
  %s6 = scalar_select 0, %s5, %s3
  $region1: #{tpu_custom_call.1} parent=0
    #allocation2 [shape = 'u8[4096]{0}', space=vmem, size = 0x1000, scoped, tag = 'input window, operand 0, single buffered']
    #allocation3 [shape = 's32[1]{0}', space=sflag, size = 0x4, scoped, tag = 'scoped memory for tpu_custom_call.1']
    #allocation4 [shape = 's32[1]{0}', space=sflag, size = 0x4, scoped, tag = 'scoped memory for tpu_custom_call.1']
    #allocation5 [shape = 'u8[32768]{0}', space=vmem, size = 0x8000, scoped, tag = 'input window, operand 1, single buffered']
    #allocation6 [shape = 's32[1]{0}', space=sflag, size = 0x4, scoped, tag = 'scoped memory for tpu_custom_call.1']
    #allocation7 [shape = 'u8[4096]{0}', space=vmem, size = 0x1000, scoped, tag = 'output window, operand 0, single buffered']
    %7 = vsyncpa [#allocation3], 0
    %8 = vsyncpa [#allocation6], 0
    %9 = vsyncpa [#allocation4], 0
    // Predicated region
    $region2: #{tpu_custom_call.1} parent=1 // pred_check
      _
    $region3: #{tpu_custom_call.1} parent=1 // pred_check_branch
      %11 = sbr.rel (0) target = $region5
    $region4: #{tpu_custom_call.1} parent=1 // pred_region
      %s13 = ssub.s32 128, 128
      %14 = vsyncadd [#allocation3], %s13
      %s15 = sshll.u32 [#allocation2], 4
      %s16 = int_to_ptr.vmem [resolvable:$true] %s15
      %21 = dma.hbm_to_vmem [thread:$0]  %s0, 128, %s16, [#allocation3], 64, 64, 4
    $region5: #{tpu_custom_call.1} parent=1 // pred_fallthru
      _
    // Predicated region
    $region6: #{tpu_custom_call.1} parent=1 // pred_check
      _
    $region7: #{tpu_custom_call.1} parent=1 // pred_check_branch
      %23 = sbr.rel (0) target = $region9
    $region8: #{tpu_custom_call.1} parent=1 // pred_region
      %s25 = ssub.s32 1024, 1024
      %26 = vsyncadd [#allocation6], %s25
      %s27 = sshll.u32 [#allocation5], 4
      %s28 = int_to_ptr.vmem [resolvable:$true] %s27
      %33 = dma.hbm_to_vmem [thread:$0]  %s1, 1024, %s28, [#allocation6], 64, 64, 4
    $region9: #{tpu_custom_call.1} parent=1 // pred_fallthru
      _
    // Predicated region
    $region10: #{tpu_custom_call.1} parent=1 // pred_check
      _
    $region11: #{tpu_custom_call.1} parent=1 // pred_check_branch
      %35 = sbr.rel (0) target = $region13
    $region12: #{tpu_custom_call.1} parent=1 // pred_region
      %36 = dma.done [#allocation3], 128
    $region13: #{tpu_custom_call.1} parent=1 // pred_fallthru
      _
    // Predicated region
    $region14: #{tpu_custom_call.1} parent=1 // pred_check
      _
    $region15: #{tpu_custom_call.1} parent=1 // pred_check_branch
      %38 = sbr.rel (0) target = $region17
    $region16: #{tpu_custom_call.1} parent=1 // pred_region
      %39 = dma.done [#allocation6], 1024
    $region17: #{tpu_custom_call.1} parent=1 // pred_fallthru
      _
    %v41 = vld [vmem:[#allocation2] sm:$0xf]
    %v42 = vld [vmem:[#allocation2 + $0x4] sm:$0xf]
    %v43 = vld [vmem:[#allocation5] sm:$0xf]
    %v44 = vld [vmem:[#allocation5 + $0x4] sm:$0xf]
    %v45 = vld [vmem:[#allocation5 + $0x8] sm:$0xf]
    %v46 = vld [vmem:[#allocation5 + $0xc] sm:$0xf]
    %v47 = vld [vmem:[#allocation5 + $0x10] sm:$0xf]
    %v48 = vld [vmem:[#allocation5 + $0x14] sm:$0xf]
    %v49 = vld [vmem:[#allocation5 + $0x18] sm:$0xf]
    %v50 = vld [vmem:[#allocation5 + $0x1c] sm:$0xf]
    %v51 = vld [vmem:[#allocation5 + $0x20] sm:$0xf]
    %v52 = vld [vmem:[#allocation5 + $0x24] sm:$0xf]
    %v53 = vld [vmem:[#allocation5 + $0x28] sm:$0xf]
    %v54 = vld [vmem:[#allocation5 + $0x2c] sm:$0xf]
    %v55 = vld [vmem:[#allocation5 + $0x30] sm:$0xf]
    %v56 = vld [vmem:[#allocation5 + $0x34] sm:$0xf]
    %v57 = vld [vmem:[#allocation5 + $0x38] sm:$0xf]
    %v58 = vld [vmem:[#allocation5 + $0x3c] sm:$0xf]
    %v61 = vunpack.c.l.b16 %v41
    %v62 = vunpack.c.l.b16 %v42
    %v63 = vpack.c.b16 %v62, %v61
    %v81 = vunpack.c.l.b16 %v43
    %v82 = vunpack.c.l.b16 %v44
    %v83 = vunpack.c.l.b16 %v45
    %v84 = vunpack.c.l.b16 %v46
    %v85 = vunpack.c.l.b16 %v47
    %v86 = vunpack.c.l.b16 %v48
    %v87 = vunpack.c.l.b16 %v49
    %v88 = vunpack.c.l.b16 %v50
    %v89 = vunpack.c.l.b16 %v51
    %v90 = vunpack.c.l.b16 %v52
    %v91 = vunpack.c.l.b16 %v53
    %v92 = vunpack.c.l.b16 %v54
    %v93 = vunpack.c.l.b16 %v55
    %v94 = vunpack.c.l.b16 %v56
    %v95 = vunpack.c.l.b16 %v57
    %v96 = vunpack.c.l.b16 %v58
    %v97 = vpack.c.b16 %v82, %v81
    %v98 = vpack.c.b16 %v84, %v83
    %v99 = vpack.c.b16 %v86, %v85
    %v100 = vpack.c.b16 %v88, %v87
    %v101 = vpack.c.b16 %v90, %v89
    %v102 = vpack.c.b16 %v92, %v91
    %v103 = vpack.c.b16 %v94, %v93
    %v104 = vpack.c.b16 %v96, %v95
    %113 = vmatprep.subr.bf16.mxu0 0
    %114 = vmatpush1.bf16.msra.mxu0 %v97
    %115 = vmatprep.subr.bf16.mxu0 0
    %116 = vmatpush1.bf16.msra.mxu0 %v98
    %117 = vmatprep.subr.bf16.mxu0 0
    %118 = vmatpush1.bf16.msra.mxu0 %v99
    %119 = vmatprep.subr.bf16.mxu0 0
    %120 = vmatpush1.bf16.msra.mxu0 %v100
    %121 = vmatprep.subr.bf16.mxu0 0
    %122 = vmatpush1.bf16.msra.mxu0 %v101
    %123 = vmatprep.subr.bf16.mxu0 0
    %124 = vmatpush1.bf16.msra.mxu0 %v102
    %125 = vmatprep.subr.bf16.mxu0 0
    %126 = vmatpush1.bf16.msra.mxu0 %v103
    %127 = vmatprep.subr.bf16.mxu0 0
    %128 = vmatpush1.bf16.msra.mxu0 %v104
    %129 = vmatprep.subr.bf16.mxu0 0
    %130 = vmatpush1.bf16.msra.mxu0 0
    %131 = vmatprep.subr.bf16.mxu0 0
    %132 = vmatpush1.bf16.msra.mxu0 0
    %133 = vmatprep.subr.bf16.mxu0 0
    %134 = vmatpush1.bf16.msra.mxu0 0
    %135 = vmatprep.subr.bf16.mxu0 0
    %136 = vmatpush1.bf16.msra.mxu0 0
    %137 = vmatprep.subr.bf16.mxu0 0
    %138 = vmatpush1.bf16.msra.mxu0 0
    %139 = vmatprep.subr.bf16.mxu0 0
    %140 = vmatpush1.bf16.msra.mxu0 0
    %141 = vmatprep.subr.bf16.mxu0 0
    %142 = vmatpush1.bf16.msra.mxu0 0
    %143 = vmatprep.subr.bf16.mxu0 0
    %144 = vmatpush1.bf16.msra.mxu0 0
    %145 = vmatprep.mubr.bf16.mxu0 0
    %146 = vmatmul.mubr.bf16.gmra.mrb[0].mxu0 %v63
    %v147 = vpop.f32.mrb[0].mxu0
    %v148 = vadd.f32 0.0, %v147
    %v149 = vpop.f32.mrb[0].mxu0
    %v150 = vpop.f32.mrb[0].mxu0
    %v151 = vadd.f32 0.0, %v150
    %v152 = vpop.f32.mrb[0].mxu0
    %153 = vdwg.mxu0
    %v154 = vpack.c.bf16 %v151, %v148
    %v156 = vunpack.c.l.b16 %v154
    %v157 = vunpack.c.h.b16 %v154
    %v158 = vpack.c.b16 %v156, %v156
    %v159 = vpack.c.b16 %v157, %v157
    %162 = vst [vmem:[#allocation7] sm:$0xf] %v158
    %163 = vst [vmem:[#allocation7 + $0x4] sm:$0xf] %v159
    // Predicated region
    $region18: #{tpu_custom_call.1} parent=1 // pred_check
      _
    $region19: #{tpu_custom_call.1} parent=1 // pred_check_branch
      %165 = sbr.rel (0) target = $region21
    $region20: #{tpu_custom_call.1} parent=1 // pred_region
      %s167 = ssub.s32 128, 128
      %168 = vsyncadd [#allocation4], %s167
      %s169 = sshll.u32 [#allocation7], 4
      %s170 = int_to_ptr.vmem [resolvable:$true] %s169
      %175 = dma.vmem_to_hbm [thread:$0]  %s170, 128, %s2, [#allocation4], 64, 64, 4
    $region21: #{tpu_custom_call.1} parent=1 // pred_fallthru
      _
    // Predicated region
    $region22: #{tpu_custom_call.1} parent=1 // pred_check
      _
    $region23: #{tpu_custom_call.1} parent=1 // pred_check_branch
      %177 = sbr.rel (0) target = $region25
    $region24: #{tpu_custom_call.1} parent=1 // pred_region
      %178 = dma.done [#allocation4], 128
    $region25: #{tpu_custom_call.1} parent=1 // pred_fallthru
      _
    %179 = vsyncpa [#allocation3], 1
    %180 = vsyncpa [#allocation6], 1
    %181 = vsyncpa [#allocation4], 1

</llo_original>
